<compile_context>
chip_gen: v7x
topology: tpu7x:2x2x1
jax: 0.10.0
libtpu: 0.0.40
codegen_flags: <defaults>
</compile_context>

<pallas_src>
import functools
import math

import jax
import jax.numpy as jnp
import numpy as np
from jax.experimental import pallas as pl
from jax.experimental.pallas import tpu as pltpu


def _sublane_pack(dtype) -> int:
    """Sublane packing granularity for a dtype (8 f32, 16 bf16, 32 int8/fp8)."""
    return max(1, 4 // jnp.dtype(dtype).itemsize) * 8


def _round_up(x: int, m: int) -> int:
    return ((x + m - 1) // m) * m


def _make_vmem_table_kernel(scale: float, rows: int):
    """Fast path: whole embedding table resident in VMEM, gather via dynamic row loads."""

    def kernel(ids_ref, table_ref, out_ref):
        i = pl.program_id(0)
        for k in range(rows):
            row = ids_ref[i * rows + k]
            v = table_ref[row, :].astype(jnp.float32) * scale
            out_ref[k, :] = v.astype(out_ref.dtype)

    return kernel


def _make_hbm_gather_kernel(scale: float, rows: int):
    """General path: `rows` outstanding row DMAs from the HBM table per grid step."""

    def kernel(ids_ref, table_ref, out_ref, gbuf, sems):
        i = pl.program_id(0)
        copies = []
        # Read all SMEM ids and issue every DMA before the first wait
        # (keeps `rows` row fetches in flight; scalar reads stay ahead of
        # the semaphore waits).
        for k in range(rows):
            row = ids_ref[i * rows + k]
            cp = pltpu.make_async_copy(table_ref.at[row], gbuf.at[k], sems.at[k])
            cp.start()
            copies.append(cp)
        for cp in copies:
            cp.wait()
        # One vectorized scale + lane-dense store of the whole tile.
        out_ref[...] = (gbuf[...].astype(jnp.float32) * scale).astype(out_ref.dtype)

    return kernel


@functools.partial(
    jax.jit,
    static_argnames=("rows_per_step", "force_gather", "vmem_table_budget_bytes"),
)
def input_embeddings(
    x_ids: jax.Array,
    embedding: jax.Array,
    *,
    rows_per_step: int = 64,
    force_gather: bool = False,
    vmem_table_budget_bytes: int = 8 * 1024 * 1024,  # conservative across v5e/v6e/v7x
):
    """Pallas equivalent of InputEmbeddings.forward.

    x_ids:     (batch, seq) integer token ids in [0, vocab_size)
    embedding: (vocab_size, d_model) table
    returns:   (batch, seq, d_model) in the table's dtype
    """
    batch, seq = x_ids.shape
    vocab_size, d_model = embedding.shape
    num_tokens = batch * seq
    scale = math.sqrt(d_model)
    itemsize = jnp.dtype(embedding.dtype).itemsize

    # Tokens per grid step: amortize per-step overhead, keep dtype-aligned.
    pack = _sublane_pack(embedding.dtype)
    rows = max(pack, _round_up(min(rows_per_step, num_tokens), pack))
    num_tiles = (num_tokens + rows - 1) // rows
    padded_tokens = num_tiles * rows

    # Clip ids (no runtime OOB check on VMEM / gather indices) and pad only the
    # ids with a valid id (0); the output itself is NOT padded — the last
    # (partial) output block is edge-masked by the pipeline.
    # NOTE: clipping silently remaps out-of-range ids (PyTorch would error).
    ids_flat = jnp.clip(x_ids.reshape(num_tokens).astype(jnp.int32), 0, vocab_size - 1)
    if padded_tokens != num_tokens:
        ids_flat = jnp.pad(ids_flat, (0, padded_tokens - num_tokens))

    out_shape = jax.ShapeDtypeStruct((num_tokens, d_model), embedding.dtype)
    out_spec = pl.BlockSpec((rows, d_model), lambda i, ids: (i, 0))

    table_bytes = vocab_size * d_model * itemsize
    use_fast = (not force_gather) and (table_bytes <= vmem_table_budget_bytes)

    if use_fast:
        grid_spec = pltpu.PrefetchScalarGridSpec(
            num_scalar_prefetch=1,
            grid=(num_tiles,),
            in_specs=[
                # Whole table as one resident block (constant index_map →
                # DMA'd once, reused every step).
                pl.BlockSpec((vocab_size, d_model), lambda i, ids: (0, 0)),
            ],
            out_specs=out_spec,
        )
        kernel = _make_vmem_table_kernel(scale, rows)
        bytes_accessed = table_bytes + num_tokens * d_model * itemsize + padded_tokens * 4
    else:
        grid_spec = pltpu.PrefetchScalarGridSpec(
            num_scalar_prefetch=1,
            grid=(num_tiles,),
            in_specs=[pl.BlockSpec(memory_space=pl.ANY)],  # table stays in HBM
            out_specs=out_spec,
            scratch_shapes=[
                pltpu.VMEM((rows, d_model), embedding.dtype),   # gathered rows
                pltpu.SemaphoreType.DMA((rows,)),               # one sem per row DMA
            ],
        )
        kernel = _make_hbm_gather_kernel(scale, rows)
        bytes_accessed = 2 * num_tokens * d_model * itemsize + padded_tokens * 4

    out_flat = pl.pallas_call(
        kernel,
        out_shape=out_shape,
        grid_spec=grid_spec,
        compiler_params=pltpu.CompilerParams(
            # Disjoint output blocks, no cross-step state → safe to shard the
            # token axis across the two TensorCores on v7x; neutral elsewhere.
            dimension_semantics=("parallel",),
        ),
        cost_estimate=pl.CostEstimate(
            flops=0, transcendentals=0, bytes_accessed=bytes_accessed
        ),
    )(ids_flat, embedding)

    return out_flat.reshape(batch, seq, d_model)


if __name__ == "__main__":
    key = jax.random.PRNGKey(0)
    k_emb, k_ids = jax.random.split(key)

    # Small, TPU-friendly shapes implied by the module.
    vocab_size, d_model = 64, 128
    # nn.Embedding default init: weight ~ N(0, 1).
    embedding = jax.random.normal(k_emb, (vocab_size, d_model), dtype=jnp.float32)
    scale = math.sqrt(d_model)

    # Exercise both the VMEM-resident fast path and the manual HBM row-gather
    # path, including a token count that is not a multiple of rows_per_step
    # (partial edge output block).
    for (batch, seq) in [(2, 8), (3, 5)]:
        k_ids, sub = jax.random.split(k_ids)
        x_ids = jax.random.randint(sub, (batch, seq), 0, vocab_size, dtype=jnp.int32)
        ref = jnp.take(embedding, x_ids, axis=0) * scale
        for force_gather in (False, True):
            out = input_embeddings(x_ids, embedding, force_gather=force_gather)
            out = jax.block_until_ready(out)
            assert out.shape == (batch, seq, d_model)
            assert out.dtype == embedding.dtype
            np.testing.assert_allclose(
                np.asarray(out), np.asarray(ref), rtol=1e-6, atol=1e-6
            )

    print("KERNEL_OK")
</pallas_src>

<mosaic_0001>
module attributes {stable_mosaic.version = 11 : i64} {
  func.func @kernel(%arg0: i32, %arg1: memref<16xi32, #tpu.memory_space<smem>>, %arg2: memref<64x128xf32, #tpu.memory_space<vmem>>, %arg3: memref<16x128xf32, #tpu.memory_space<vmem>>) attributes {dimension_semantics = [#tpu.dimension_semantics<parallel>], iteration_bounds = array<i64: 1>, scalar_prefetch = 1 : i64, scratch_operands = 0 : i64, tpu.core_type = #tpu.core_type<tc>, window_params = [{pipeline_mode = #tpu.pipeline_mode<synchronous>, transform_indices = @transform_0, window_bounds = array<i64: 64, 128>}, {transform_indices = @transform_1, window_bounds = array<i64: 16, 128>}]} {
    %c16_i32 = arith.constant 16 : i32
    %0 = arith.muli %arg0, %c16_i32 : i32
    %c0_i32 = arith.constant 0 : i32
    %1 = arith.addi %0, %c0_i32 : i32
    %2 = arith.index_cast %1 : i32 to index
    %3 = memref.load %arg1[%2] : memref<16xi32, #tpu.memory_space<smem>>
    %4 = arith.index_cast %3 : i32 to index
    %c0 = arith.constant 0 : index
    %5 = vector.load %arg2[%4, %c0] : memref<64x128xf32, #tpu.memory_space<vmem>>, vector<1x128xf32>
    %6 = vector.shape_cast %5 : vector<1x128xf32> to vector<128xf32>
    %cst = arith.constant 11.3137083 : f32
    %7 = vector.broadcast %cst : f32 to vector<128xf32>
    %8 = arith.mulf %6, %7 : vector<128xf32>
    %c0_0 = arith.constant 0 : index
    %c0_1 = arith.constant 0 : index
    %9 = vector.load %arg3[%c0_0, %c0_1] : memref<16x128xf32, #tpu.memory_space<vmem>>, vector<1x128xf32>
    %10 = vector.shape_cast %9 : vector<1x128xf32> to vector<128xf32>
    %11 = vector.shape_cast %8 : vector<128xf32> to vector<1x128xf32>
    tpu.vector_store %arg3[%c0_0, %c0_1], %11 {strides = array<i32>} : memref<16x128xf32, #tpu.memory_space<vmem>>, vector<1x128xf32>,
    %c16_i32_2 = arith.constant 16 : i32
    %12 = arith.muli %arg0, %c16_i32_2 : i32
    %c1_i32 = arith.constant 1 : i32
    %13 = arith.addi %12, %c1_i32 : i32
    %14 = arith.index_cast %13 : i32 to index
    %15 = memref.load %arg1[%14] : memref<16xi32, #tpu.memory_space<smem>>
    %16 = arith.index_cast %15 : i32 to index
    %c0_3 = arith.constant 0 : index
    %17 = vector.load %arg2[%16, %c0_3] : memref<64x128xf32, #tpu.memory_space<vmem>>, vector<1x128xf32>
    %18 = vector.shape_cast %17 : vector<1x128xf32> to vector<128xf32>
    %cst_4 = arith.constant 11.3137083 : f32
    %19 = vector.broadcast %cst_4 : f32 to vector<128xf32>
    %20 = arith.mulf %18, %19 : vector<128xf32>
    %c1 = arith.constant 1 : index
    %c0_5 = arith.constant 0 : index
    %21 = vector.load %arg3[%c1, %c0_5] : memref<16x128xf32, #tpu.memory_space<vmem>>, vector<1x128xf32>
    %22 = vector.shape_cast %21 : vector<1x128xf32> to vector<128xf32>
    %23 = vector.shape_cast %20 : vector<128xf32> to vector<1x128xf32>
    tpu.vector_store %arg3[%c1, %c0_5], %23 {strides = array<i32>} : memref<16x128xf32, #tpu.memory_space<vmem>>, vector<1x128xf32>,
    %c16_i32_6 = arith.constant 16 : i32
    %24 = arith.muli %arg0, %c16_i32_6 : i32
    %c2_i32 = arith.constant 2 : i32
    %25 = arith.addi %24, %c2_i32 : i32
    %26 = arith.index_cast %25 : i32 to index
    %27 = memref.load %arg1[%26] : memref<16xi32, #tpu.memory_space<smem>>
    %28 = arith.index_cast %27 : i32 to index
    %c0_7 = arith.constant 0 : index
    %29 = vector.load %arg2[%28, %c0_7] : memref<64x128xf32, #tpu.memory_space<vmem>>, vector<1x128xf32>
    %30 = vector.shape_cast %29 : vector<1x128xf32> to vector<128xf32>
    %cst_8 = arith.constant 11.3137083 : f32
    %31 = vector.broadcast %cst_8 : f32 to vector<128xf32>
    %32 = arith.mulf %30, %31 : vector<128xf32>
    %c2 = arith.constant 2 : index
    %c0_9 = arith.constant 0 : index
    %33 = vector.load %arg3[%c2, %c0_9] : memref<16x128xf32, #tpu.memory_space<vmem>>, vector<1x128xf32>
    %34 = vector.shape_cast %33 : vector<1x128xf32> to vector<128xf32>
    %35 = vector.shape_cast %32 : vector<128xf32> to vector<1x128xf32>
    tpu.vector_store %arg3[%c2, %c0_9], %35 {strides = array<i32>} : memref<16x128xf32, #tpu.memory_space<vmem>>, vector<1x128xf32>,
    %c16_i32_10 = arith.constant 16 : i32
    %36 = arith.muli %arg0, %c16_i32_10 : i32
    %c3_i32 = arith.constant 3 : i32
    %37 = arith.addi %36, %c3_i32 : i32
    %38 = arith.index_cast %37 : i32 to index
    %39 = memref.load %arg1[%38] : memref<16xi32, #tpu.memory_space<smem>>
    %40 = arith.index_cast %39 : i32 to index
    %c0_11 = arith.constant 0 : index
    %41 = vector.load %arg2[%40, %c0_11] : memref<64x128xf32, #tpu.memory_space<vmem>>, vector<1x128xf32>
    %42 = vector.shape_cast %41 : vector<1x128xf32> to vector<128xf32>
    %cst_12 = arith.constant 11.3137083 : f32
    %43 = vector.broadcast %cst_12 : f32 to vector<128xf32>
    %44 = arith.mulf %42, %43 : vector<128xf32>
    %c3 = arith.constant 3 : index
    %c0_13 = arith.constant 0 : index
    %45 = vector.load %arg3[%c3, %c0_13] : memref<16x128xf32, #tpu.memory_space<vmem>>, vector<1x128xf32>
    %46 = vector.shape_cast %45 : vector<1x128xf32> to vector<128xf32>
    %47 = vector.shape_cast %44 : vector<128xf32> to vector<1x128xf32>
    tpu.vector_store %arg3[%c3, %c0_13], %47 {strides = array<i32>} : memref<16x128xf32, #tpu.memory_space<vmem>>, vector<1x128xf32>,
    %c16_i32_14 = arith.constant 16 : i32
    %48 = arith.muli %arg0, %c16_i32_14 : i32
    %c4_i32 = arith.constant 4 : i32
    %49 = arith.addi %48, %c4_i32 : i32
    %50 = arith.index_cast %49 : i32 to index
    %51 = memref.load %arg1[%50] : memref<16xi32, #tpu.memory_space<smem>>
    %52 = arith.index_cast %51 : i32 to index
    %c0_15 = arith.constant 0 : index
    %53 = vector.load %arg2[%52, %c0_15] : memref<64x128xf32, #tpu.memory_space<vmem>>, vector<1x128xf32>
    %54 = vector.shape_cast %53 : vector<1x128xf32> to vector<128xf32>
    %cst_16 = arith.constant 11.3137083 : f32
    %55 = vector.broadcast %cst_16 : f32 to vector<128xf32>
    %56 = arith.mulf %54, %55 : vector<128xf32>
    %c4 = arith.constant 4 : index
    %c0_17 = arith.constant 0 : index
    %57 = vector.load %arg3[%c4, %c0_17] : memref<16x128xf32, #tpu.memory_space<vmem>>, vector<1x128xf32>
    %58 = vector.shape_cast %57 : vector<1x128xf32> to vector<128xf32>
    %59 = vector.shape_cast %56 : vector<128xf32> to vector<1x128xf32>
    tpu.vector_store %arg3[%c4, %c0_17], %59 {strides = array<i32>} : memref<16x128xf32, #tpu.memory_space<vmem>>, vector<1x128xf32>,
    %c16_i32_18 = arith.constant 16 : i32
    %60 = arith.muli %arg0, %c16_i32_18 : i32
    %c5_i32 = arith.constant 5 : i32
    %61 = arith.addi %60, %c5_i32 : i32
    %62 = arith.index_cast %61 : i32 to index
    %63 = memref.load %arg1[%62] : memref<16xi32, #tpu.memory_space<smem>>
    %64 = arith.index_cast %63 : i32 to index
    %c0_19 = arith.constant 0 : index
    %65 = vector.load %arg2[%64, %c0_19] : memref<64x128xf32, #tpu.memory_space<vmem>>, vector<1x128xf32>
    %66 = vector.shape_cast %65 : vector<1x128xf32> to vector<128xf32>
    %cst_20 = arith.constant 11.3137083 : f32
    %67 = vector.broadcast %cst_20 : f32 to vector<128xf32>
    %68 = arith.mulf %66, %67 : vector<128xf32>
    %c5 = arith.constant 5 : index
    %c0_21 = arith.constant 0 : index
    %69 = vector.load %arg3[%c5, %c0_21] : memref<16x128xf32, #tpu.memory_space<vmem>>, vector<1x128xf32>
    %70 = vector.shape_cast %69 : vector<1x128xf32> to vector<128xf32>
    %71 = vector.shape_cast %68 : vector<128xf32> to vector<1x128xf32>
    tpu.vector_store %arg3[%c5, %c0_21], %71 {strides = array<i32>} : memref<16x128xf32, #tpu.memory_space<vmem>>, vector<1x128xf32>,
    %c16_i32_22 = arith.constant 16 : i32
    %72 = arith.muli %arg0, %c16_i32_22 : i32
    %c6_i32 = arith.constant 6 : i32
    %73 = arith.addi %72, %c6_i32 : i32
    %74 = arith.index_cast %73 : i32 to index
    %75 = memref.load %arg1[%74] : memref<16xi32, #tpu.memory_space<smem>>
    %76 = arith.index_cast %75 : i32 to index
    %c0_23 = arith.constant 0 : index
    %77 = vector.load %arg2[%76, %c0_23] : memref<64x128xf32, #tpu.memory_space<vmem>>, vector<1x128xf32>
    %78 = vector.shape_cast %77 : vector<1x128xf32> to vector<128xf32>
    %cst_24 = arith.constant 11.3137083 : f32
    %79 = vector.broadcast %cst_24 : f32 to vector<128xf32>
    %80 = arith.mulf %78, %79 : vector<128xf32>
    %c6 = arith.constant 6 : index
    %c0_25 = arith.constant 0 : index
    %81 = vector.load %arg3[%c6, %c0_25] : memref<16x128xf32, #tpu.memory_space<vmem>>, vector<1x128xf32>
    %82 = vector.shape_cast %81 : vector<1x128xf32> to vector<128xf32>
    %83 = vector.shape_cast %80 : vector<128xf32> to vector<1x128xf32>
    tpu.vector_store %arg3[%c6, %c0_25], %83 {strides = array<i32>} : memref<16x128xf32, #tpu.memory_space<vmem>>, vector<1x128xf32>,
    %c16_i32_26 = arith.constant 16 : i32
    %84 = arith.muli %arg0, %c16_i32_26 : i32
    %c7_i32 = arith.constant 7 : i32
    %85 = arith.addi %84, %c7_i32 : i32
    %86 = arith.index_cast %85 : i32 to index
    %87 = memref.load %arg1[%86] : memref<16xi32, #tpu.memory_space<smem>>
    %88 = arith.index_cast %87 : i32 to index
    %c0_27 = arith.constant 0 : index
    %89 = vector.load %arg2[%88, %c0_27] : memref<64x128xf32, #tpu.memory_space<vmem>>, vector<1x128xf32>
    %90 = vector.shape_cast %89 : vector<1x128xf32> to vector<128xf32>
    %cst_28 = arith.constant 11.3137083 : f32
    %91 = vector.broadcast %cst_28 : f32 to vector<128xf32>
    %92 = arith.mulf %90, %91 : vector<128xf32>
    %c7 = arith.constant 7 : index
    %c0_29 = arith.constant 0 : index
    %93 = vector.load %arg3[%c7, %c0_29] : memref<16x128xf32, #tpu.memory_space<vmem>>, vector<1x128xf32>
    %94 = vector.shape_cast %93 : vector<1x128xf32> to vector<128xf32>
    %95 = vector.shape_cast %92 : vector<128xf32> to vector<1x128xf32>
    tpu.vector_store %arg3[%c7, %c0_29], %95 {strides = array<i32>} : memref<16x128xf32, #tpu.memory_space<vmem>>, vector<1x128xf32>,
    %c16_i32_30 = arith.constant 16 : i32
    %96 = arith.muli %arg0, %c16_i32_30 : i32
    %c8_i32 = arith.constant 8 : i32
    %97 = arith.addi %96, %c8_i32 : i32
    %98 = arith.index_cast %97 : i32 to index
    %99 = memref.load %arg1[%98] : memref<16xi32, #tpu.memory_space<smem>>
    %100 = arith.index_cast %99 : i32 to index
    %c0_31 = arith.constant 0 : index
    %101 = vector.load %arg2[%100, %c0_31] : memref<64x128xf32, #tpu.memory_space<vmem>>, vector<1x128xf32>
    %102 = vector.shape_cast %101 : vector<1x128xf32> to vector<128xf32>
    %cst_32 = arith.constant 11.3137083 : f32
    %103 = vector.broadcast %cst_32 : f32 to vector<128xf32>
    %104 = arith.mulf %102, %103 : vector<128xf32>
    %c8 = arith.constant 8 : index
    %c0_33 = arith.constant 0 : index
    %105 = vector.load %arg3[%c8, %c0_33] : memref<16x128xf32, #tpu.memory_space<vmem>>, vector<1x128xf32>
    %106 = vector.shape_cast %105 : vector<1x128xf32> to vector<128xf32>
    %107 = vector.shape_cast %104 : vector<128xf32> to vector<1x128xf32>
    tpu.vector_store %arg3[%c8, %c0_33], %107 {strides = array<i32>} : memref<16x128xf32, #tpu.memory_space<vmem>>, vector<1x128xf32>,
    %c16_i32_34 = arith.constant 16 : i32
    %108 = arith.muli %arg0, %c16_i32_34 : i32
    %c9_i32 = arith.constant 9 : i32
    %109 = arith.addi %108, %c9_i32 : i32
    %110 = arith.index_cast %109 : i32 to index
    %111 = memref.load %arg1[%110] : memref<16xi32, #tpu.memory_space<smem>>
    %112 = arith.index_cast %111 : i32 to index
    %c0_35 = arith.constant 0 : index
    %113 = vector.load %arg2[%112, %c0_35] : memref<64x128xf32, #tpu.memory_space<vmem>>, vector<1x128xf32>
    %114 = vector.shape_cast %113 : vector<1x128xf32> to vector<128xf32>
    %cst_36 = arith.constant 11.3137083 : f32
    %115 = vector.broadcast %cst_36 : f32 to vector<128xf32>
    %116 = arith.mulf %114, %115 : vector<128xf32>
    %c9 = arith.constant 9 : index
    %c0_37 = arith.constant 0 : index
    %117 = vector.load %arg3[%c9, %c0_37] : memref<16x128xf32, #tpu.memory_space<vmem>>, vector<1x128xf32>
    %118 = vector.shape_cast %117 : vector<1x128xf32> to vector<128xf32>
    %119 = vector.shape_cast %116 : vector<128xf32> to vector<1x128xf32>
    tpu.vector_store %arg3[%c9, %c0_37], %119 {strides = array<i32>} : memref<16x128xf32, #tpu.memory_space<vmem>>, vector<1x128xf32>,
    %c16_i32_38 = arith.constant 16 : i32
    %120 = arith.muli %arg0, %c16_i32_38 : i32
    %c10_i32 = arith.constant 10 : i32
    %121 = arith.addi %120, %c10_i32 : i32
    %122 = arith.index_cast %121 : i32 to index
    %123 = memref.load %arg1[%122] : memref<16xi32, #tpu.memory_space<smem>>
    %124 = arith.index_cast %123 : i32 to index
    %c0_39 = arith.constant 0 : index
    %125 = vector.load %arg2[%124, %c0_39] : memref<64x128xf32, #tpu.memory_space<vmem>>, vector<1x128xf32>
    %126 = vector.shape_cast %125 : vector<1x128xf32> to vector<128xf32>
    %cst_40 = arith.constant 11.3137083 : f32
    %127 = vector.broadcast %cst_40 : f32 to vector<128xf32>
    %128 = arith.mulf %126, %127 : vector<128xf32>
    %c10 = arith.constant 10 : index
    %c0_41 = arith.constant 0 : index
    %129 = vector.load %arg3[%c10, %c0_41] : memref<16x128xf32, #tpu.memory_space<vmem>>, vector<1x128xf32>
    %130 = vector.shape_cast %129 : vector<1x128xf32> to vector<128xf32>
    %131 = vector.shape_cast %128 : vector<128xf32> to vector<1x128xf32>
    tpu.vector_store %arg3[%c10, %c0_41], %131 {strides = array<i32>} : memref<16x128xf32, #tpu.memory_space<vmem>>, vector<1x128xf32>,
    %c16_i32_42 = arith.constant 16 : i32
    %132 = arith.muli %arg0, %c16_i32_42 : i32
    %c11_i32 = arith.constant 11 : i32
    %133 = arith.addi %132, %c11_i32 : i32
    %134 = arith.index_cast %133 : i32 to index
    %135 = memref.load %arg1[%134] : memref<16xi32, #tpu.memory_space<smem>>
    %136 = arith.index_cast %135 : i32 to index
    %c0_43 = arith.constant 0 : index
    %137 = vector.load %arg2[%136, %c0_43] : memref<64x128xf32, #tpu.memory_space<vmem>>, vector<1x128xf32>
    %138 = vector.shape_cast %137 : vector<1x128xf32> to vector<128xf32>
    %cst_44 = arith.constant 11.3137083 : f32
    %139 = vector.broadcast %cst_44 : f32 to vector<128xf32>
    %140 = arith.mulf %138, %139 : vector<128xf32>
    %c11 = arith.constant 11 : index
    %c0_45 = arith.constant 0 : index
    %141 = vector.load %arg3[%c11, %c0_45] : memref<16x128xf32, #tpu.memory_space<vmem>>, vector<1x128xf32>
    %142 = vector.shape_cast %141 : vector<1x128xf32> to vector<128xf32>
    %143 = vector.shape_cast %140 : vector<128xf32> to vector<1x128xf32>
    tpu.vector_store %arg3[%c11, %c0_45], %143 {strides = array<i32>} : memref<16x128xf32, #tpu.memory_space<vmem>>, vector<1x128xf32>,
    %c16_i32_46 = arith.constant 16 : i32
    %144 = arith.muli %arg0, %c16_i32_46 : i32
    %c12_i32 = arith.constant 12 : i32
    %145 = arith.addi %144, %c12_i32 : i32
    %146 = arith.index_cast %145 : i32 to index
    %147 = memref.load %arg1[%146] : memref<16xi32, #tpu.memory_space<smem>>
    %148 = arith.index_cast %147 : i32 to index
    %c0_47 = arith.constant 0 : index
    %149 = vector.load %arg2[%148, %c0_47] : memref<64x128xf32, #tpu.memory_space<vmem>>, vector<1x128xf32>
    %150 = vector.shape_cast %149 : vector<1x128xf32> to vector<128xf32>
    %cst_48 = arith.constant 11.3137083 : f32
    %151 = vector.broadcast %cst_48 : f32 to vector<128xf32>
    %152 = arith.mulf %150, %151 : vector<128xf32>
    %c12 = arith.constant 12 : index
    %c0_49 = arith.constant 0 : index
    %153 = vector.load %arg3[%c12, %c0_49] : memref<16x128xf32, #tpu.memory_space<vmem>>, vector<1x128xf32>
    %154 = vector.shape_cast %153 : vector<1x128xf32> to vector<128xf32>
    %155 = vector.shape_cast %152 : vector<128xf32> to vector<1x128xf32>
    tpu.vector_store %arg3[%c12, %c0_49], %155 {strides = array<i32>} : memref<16x128xf32, #tpu.memory_space<vmem>>, vector<1x128xf32>,
    %c16_i32_50 = arith.constant 16 : i32
    %156 = arith.muli %arg0, %c16_i32_50 : i32
    %c13_i32 = arith.constant 13 : i32
    %157 = arith.addi %156, %c13_i32 : i32
    %158 = arith.index_cast %157 : i32 to index
    %159 = memref.load %arg1[%158] : memref<16xi32, #tpu.memory_space<smem>>
    %160 = arith.index_cast %159 : i32 to index
    %c0_51 = arith.constant 0 : index
    %161 = vector.load %arg2[%160, %c0_51] : memref<64x128xf32, #tpu.memory_space<vmem>>, vector<1x128xf32>
    %162 = vector.shape_cast %161 : vector<1x128xf32> to vector<128xf32>
    %cst_52 = arith.constant 11.3137083 : f32
    %163 = vector.broadcast %cst_52 : f32 to vector<128xf32>
    %164 = arith.mulf %162, %163 : vector<128xf32>
    %c13 = arith.constant 13 : index
    %c0_53 = arith.constant 0 : index
    %165 = vector.load %arg3[%c13, %c0_53] : memref<16x128xf32, #tpu.memory_space<vmem>>, vector<1x128xf32>
    %166 = vector.shape_cast %165 : vector<1x128xf32> to vector<128xf32>
    %167 = vector.shape_cast %164 : vector<128xf32> to vector<1x128xf32>
    tpu.vector_store %arg3[%c13, %c0_53], %167 {strides = array<i32>} : memref<16x128xf32, #tpu.memory_space<vmem>>, vector<1x128xf32>,
    %c16_i32_54 = arith.constant 16 : i32
    %168 = arith.muli %arg0, %c16_i32_54 : i32
    %c14_i32 = arith.constant 14 : i32
    %169 = arith.addi %168, %c14_i32 : i32
    %170 = arith.index_cast %169 : i32 to index
    %171 = memref.load %arg1[%170] : memref<16xi32, #tpu.memory_space<smem>>
    %172 = arith.index_cast %171 : i32 to index
    %c0_55 = arith.constant 0 : index
    %173 = vector.load %arg2[%172, %c0_55] : memref<64x128xf32, #tpu.memory_space<vmem>>, vector<1x128xf32>
    %174 = vector.shape_cast %173 : vector<1x128xf32> to vector<128xf32>
    %cst_56 = arith.constant 11.3137083 : f32
    %175 = vector.broadcast %cst_56 : f32 to vector<128xf32>
    %176 = arith.mulf %174, %175 : vector<128xf32>
    %c14 = arith.constant 14 : index
    %c0_57 = arith.constant 0 : index
    %177 = vector.load %arg3[%c14, %c0_57] : memref<16x128xf32, #tpu.memory_space<vmem>>, vector<1x128xf32>
    %178 = vector.shape_cast %177 : vector<1x128xf32> to vector<128xf32>
    %179 = vector.shape_cast %176 : vector<128xf32> to vector<1x128xf32>
    tpu.vector_store %arg3[%c14, %c0_57], %179 {strides = array<i32>} : memref<16x128xf32, #tpu.memory_space<vmem>>, vector<1x128xf32>,
    %c16_i32_58 = arith.constant 16 : i32
    %180 = arith.muli %arg0, %c16_i32_58 : i32
    %c15_i32 = arith.constant 15 : i32
    %181 = arith.addi %180, %c15_i32 : i32
    %182 = arith.index_cast %181 : i32 to index
    %183 = memref.load %arg1[%182] : memref<16xi32, #tpu.memory_space<smem>>
    %184 = arith.index_cast %183 : i32 to index
    %c0_59 = arith.constant 0 : index
    %185 = vector.load %arg2[%184, %c0_59] : memref<64x128xf32, #tpu.memory_space<vmem>>, vector<1x128xf32>
    %186 = vector.shape_cast %185 : vector<1x128xf32> to vector<128xf32>
    %cst_60 = arith.constant 11.3137083 : f32
    %187 = vector.broadcast %cst_60 : f32 to vector<128xf32>
    %188 = arith.mulf %186, %187 : vector<128xf32>
    %c15 = arith.constant 15 : index
    %c0_61 = arith.constant 0 : index
    %189 = vector.load %arg3[%c15, %c0_61] : memref<16x128xf32, #tpu.memory_space<vmem>>, vector<1x128xf32>
    %190 = vector.shape_cast %189 : vector<1x128xf32> to vector<128xf32>
    %191 = vector.shape_cast %188 : vector<128xf32> to vector<1x128xf32>
    tpu.vector_store %arg3[%c15, %c0_61], %191 {strides = array<i32>} : memref<16x128xf32, #tpu.memory_space<vmem>>, vector<1x128xf32>,
    return
  }
  func.func @transform_0(%arg0: i32, %arg1: memref<16xi32, #tpu.memory_space<smem>>) -> (i32, i32) {
    %c0_i32 = arith.constant 0 : i32
    %c0_i32_0 = arith.constant 0 : i32
    %c0_i32_1 = arith.constant 0 : i32
    return %c0_i32, %c0_i32_0 : i32, i32
  }
  func.func @transform_1(%arg0: i32, %arg1: memref<16xi32, #tpu.memory_space<smem>>) -> (i32, i32) {
    %c0_i32 = arith.constant 0 : i32
    %c0_i32_0 = arith.constant 0 : i32
    return %arg0, %c0_i32 : i32, i32
  }
}

</mosaic_0001>

<llo_original>
// kernel: input_embeddings.1
$region0: #{input_embeddings.1}
  #allocation0 [shape = 'u32[]', space=smem, size = 0x4, offset = 0x4, fixed_abs, tag = 'smem constant byte address 0x4 - core index']
  #allocation1 [shape = 'u32[144,128]{1,0:T(1,128)}', space=vmem, size = 0x12000, scoped, tag = 'internal scratch']
  #allocation2 [shape = 's32[1]{0}', space=sflag, size = 0x4, scoped, tag = 'scoped memory for input_embeddings.1']
  #allocation3 [shape = 'u8[512]{0}', space=smem, size = 0x200, scoped, tag = 'prefetched SMEM operand 0']
  %s0 = inlined_call_operand.vmem [shape: s32[16], index: 0, kind: input, shape index: {}]
  %s1 = inlined_call_operand.hbm [shape: f32[64,128], index: 1, kind: input, shape index: {}]
  %s2 = inlined_call_operand.hbm [shape: f32[16,128], index: 2, kind: output, shape index: {}]
  %s3 = sld [smem:[#allocation0]]
  $region18: #{input_embeddings.1} parent=0
    _
  %s5 = ssub.s32 1, %s3
  %s6 = scalar_select 0, %s5, %s3
  %s7 = sshll.u32 %s0, 4
  %s8 = int_to_ptr.vmem [resolvable:$true] %s7
  %10 = dma.vmem_to_smem %s8, 16, [#allocation3], [#allocation2]
  %11 = dma.done [#allocation2], 16
  %12 = sfence
  $region1: #{input_embeddings.1} parent=0
    #allocation4 [shape = 'u8[32768]{0}', space=vmem, size = 0x8000, scoped, tag = 'input window, operand 1, single buffered']
    #allocation5 [shape = 's32[1]{0}', space=sflag, size = 0x4, scoped, tag = 'scoped memory for input_embeddings.1']
    #allocation6 [shape = 's32[1]{0}', space=sflag, size = 0x4, scoped, tag = 'scoped memory for input_embeddings.1']
    #allocation7 [shape = 'u8[8192]{0}', space=vmem, size = 0x2000, scoped, tag = 'output window, operand 0, single buffered']
    %13 = vsyncpa [#allocation5], 0
    %14 = vsyncpa [#allocation6], 0
    // Predicated region
    $region2: #{input_embeddings.1} parent=1 // pred_check
      _
    $region3: #{input_embeddings.1} parent=1 // pred_check_branch
      %16 = sbr.rel (0) target = $region5
    $region4: #{input_embeddings.1} parent=1 // pred_region
      %s18 = ssub.s32 1024, 1024
      %19 = vsyncadd [#allocation5], %s18
      %s20 = sshll.u32 [#allocation4], 4
      %s21 = int_to_ptr.vmem [resolvable:$true] %s20
      %26 = dma.hbm_to_vmem [thread:$0]  %s1, 1024, %s21, [#allocation5], 128, 128, 8
    $region5: #{input_embeddings.1} parent=1 // pred_fallthru
      _
    // Predicated region
    $region6: #{input_embeddings.1} parent=1 // pred_check
      _
    $region7: #{input_embeddings.1} parent=1 // pred_check_branch
      %28 = sbr.rel (0) target = $region9
    $region8: #{input_embeddings.1} parent=1 // pred_region
      %29 = dma.done [#allocation5], 1024
    $region9: #{input_embeddings.1} parent=1 // pred_fallthru
      _
    %s30 = smul.u32 0, 16
    %s31 = sld [smem:[#allocation3 + %s30]]
    %s32 = scalar_lea.vmem [#allocation4], %s31
    %v33 = vld [vmem:[%s32] sm:$0x1]
    %v34 = vmul.f32 %v33, 11.313708
    %35 = vst [vmem:[#allocation7] sm:$0x1] %v34
    %s36 = sadd.s32 %s30, 1
    %s37 = sld [smem:[#allocation3 + %s36]]
    %s38 = scalar_lea.vmem [#allocation4], %s37
    %v39 = vld [vmem:[%s38] sm:$0x1]
    %v40 = vmul.f32 %v39, 11.313708
    %41 = vst [vmem:[#allocation7 + $0x1] sm:$0x1] %v40
    %s42 = sadd.s32 %s30, 2
    %s43 = sld [smem:[#allocation3 + %s42]]
    %s44 = scalar_lea.vmem [#allocation4], %s43
    %v45 = vld [vmem:[%s44] sm:$0x1]
    %v46 = vmul.f32 %v45, 11.313708
    %47 = vst [vmem:[#allocation7 + $0x2] sm:$0x1] %v46
    %s48 = sadd.s32 %s30, 3
    %s49 = sld [smem:[#allocation3 + %s48]]
    %s50 = scalar_lea.vmem [#allocation4], %s49
    %v51 = vld [vmem:[%s50] sm:$0x1]
    %v52 = vmul.f32 %v51, 11.313708
    %53 = vst [vmem:[#allocation7 + $0x3] sm:$0x1] %v52
    %s54 = sadd.s32 %s30, 4
    %s55 = sld [smem:[#allocation3 + %s54]]
    %s56 = scalar_lea.vmem [#allocation4], %s55
    %v57 = vld [vmem:[%s56] sm:$0x1]
    %v58 = vmul.f32 %v57, 11.313708
    %59 = vst [vmem:[#allocation7 + $0x4] sm:$0x1] %v58
    %s60 = sadd.s32 %s30, 5
    %s61 = sld [smem:[#allocation3 + %s60]]
    %s62 = scalar_lea.vmem [#allocation4], %s61
    %v63 = vld [vmem:[%s62] sm:$0x1]
    %v64 = vmul.f32 %v63, 11.313708
    %65 = vst [vmem:[#allocation7 + $0x5] sm:$0x1] %v64
    %s66 = sadd.s32 %s30, 6
    %s67 = sld [smem:[#allocation3 + %s66]]
    %s68 = scalar_lea.vmem [#allocation4], %s67
    %v69 = vld [vmem:[%s68] sm:$0x1]
    %v70 = vmul.f32 %v69, 11.313708
    %71 = vst [vmem:[#allocation7 + $0x6] sm:$0x1] %v70
    %s72 = sadd.s32 %s30, 7
    %s73 = sld [smem:[#allocation3 + %s72]]
    %s74 = scalar_lea.vmem [#allocation4], %s73
    %v75 = vld [vmem:[%s74] sm:$0x1]
    %v76 = vmul.f32 %v75, 11.313708
    %77 = vst [vmem:[#allocation7 + $0x7] sm:$0x1] %v76
    %s78 = sadd.s32 %s30, 8
    %s79 = sld [smem:[#allocation3 + %s78]]
    %s80 = scalar_lea.vmem [#allocation4], %s79
    %v81 = vld [vmem:[%s80] sm:$0x1]
    %v82 = vmul.f32 %v81, 11.313708
    %83 = vst [vmem:[#allocation7 + $0x8] sm:$0x1] %v82
    %s84 = sadd.s32 %s30, 9
    %s85 = sld [smem:[#allocation3 + %s84]]
    %s86 = scalar_lea.vmem [#allocation4], %s85
    %v87 = vld [vmem:[%s86] sm:$0x1]
    %v88 = vmul.f32 %v87, 11.313708
    %89 = vst [vmem:[#allocation7 + $0x9] sm:$0x1] %v88
    %s90 = sadd.s32 %s30, 10
    %s91 = sld [smem:[#allocation3 + %s90]]
    %s92 = scalar_lea.vmem [#allocation4], %s91
    %v93 = vld [vmem:[%s92] sm:$0x1]
    %v94 = vmul.f32 %v93, 11.313708
    %95 = vst [vmem:[#allocation7 + $0xa] sm:$0x1] %v94
    %s96 = sadd.s32 %s30, 11
    %s97 = sld [smem:[#allocation3 + %s96]]
    %s98 = scalar_lea.vmem [#allocation4], %s97
    %v99 = vld [vmem:[%s98] sm:$0x1]
    %v100 = vmul.f32 %v99, 11.313708
    %101 = vst [vmem:[#allocation7 + $0xb] sm:$0x1] %v100
    %s102 = sadd.s32 %s30, 12
    %s103 = sld [smem:[#allocation3 + %s102]]
    %s104 = scalar_lea.vmem [#allocation4], %s103
    %v105 = vld [vmem:[%s104] sm:$0x1]
    %v106 = vmul.f32 %v105, 11.313708
    %107 = vst [vmem:[#allocation7 + $0xc] sm:$0x1] %v106
    %s108 = sadd.s32 %s30, 13
    %s109 = sld [smem:[#allocation3 + %s108]]
    %s110 = scalar_lea.vmem [#allocation4], %s109
    %v111 = vld [vmem:[%s110] sm:$0x1]
    %v112 = vmul.f32 %v111, 11.313708
    %113 = vst [vmem:[#allocation7 + $0xd] sm:$0x1] %v112
    %s114 = sadd.s32 %s30, 14
    %s115 = sld [smem:[#allocation3 + %s114]]
    %s116 = scalar_lea.vmem [#allocation4], %s115
    %v117 = vld [vmem:[%s116] sm:$0x1]
    %v118 = vmul.f32 %v117, 11.313708
    %119 = vst [vmem:[#allocation7 + $0xe] sm:$0x1] %v118
    %s120 = sadd.s32 %s30, 15
    %s121 = sld [smem:[#allocation3 + %s120]]
    %s122 = scalar_lea.vmem [#allocation4], %s121
    %v123 = vld [vmem:[%s122] sm:$0x1]
    %v124 = vmul.f32 %v123, 11.313708
    %125 = vst [vmem:[#allocation7 + $0xf] sm:$0x1] %v124
    // Predicated region
    $region10: #{input_embeddings.1} parent=1 // pred_check
      _
    $region11: #{input_embeddings.1} parent=1 // pred_check_branch
      %127 = sbr.rel (0) target = $region13
    $region12: #{input_embeddings.1} parent=1 // pred_region
      %s129 = ssub.s32 256, 256
      %130 = vsyncadd [#allocation6], %s129
      %s131 = sshll.u32 [#allocation7], 4
      %s132 = int_to_ptr.vmem [resolvable:$true] %s131
      %137 = dma.vmem_to_hbm [thread:$0]  %s132, 256, %s2, [#allocation6], 128, 128, 8
    $region13: #{input_embeddings.1} parent=1 // pred_fallthru
      _
    // Predicated region
    $region14: #{input_embeddings.1} parent=1 // pred_check
      _
    $region15: #{input_embeddings.1} parent=1 // pred_check_branch
      %139 = sbr.rel (0) target = $region17
    $region16: #{input_embeddings.1} parent=1 // pred_region
      %140 = dma.done [#allocation6], 256
    $region17: #{input_embeddings.1} parent=1 // pred_fallthru
      _
    %141 = vsyncpa [#allocation5], 1
    %142 = vsyncpa [#allocation6], 1

</llo_original>
